<compile_context>
chip_gen: v7x
topology: tpu7x:2x2x1
jax: 0.10.0
libtpu: 0.0.40
codegen_flags: <defaults>
</compile_context>

<pallas_src>
import functools

import jax
import jax.numpy as jnp
from jax.experimental import pallas as pl
from jax.experimental.pallas import tpu as pltpu

_LANE = 128


def _round_up(n, m):
    return ((n + m - 1) // m) * m


def _scalenorm_kernel(scale_ref, x_ref, o_ref, *, eps, seg):
    """Normalize one (blk, width) tile.

    seg == width : each tile row is one logical (B, T) row -> plain lane reduce.
    seg <  width : lane-dense packing; each 128-lane tile row holds width//seg
                   logical rows.  Per-segment sums (broadcast across each
                   segment's lanes) are computed as xsq @ block_diag(ones) on
                   the MXU so every lane ends up holding its own row's sum(x^2).
    """
    xf = x_ref[...].astype(jnp.float32)
    xsq = xf * xf
    lanes = xsq.shape[-1]

    if seg == lanes:
        ss = jnp.sum(xsq, axis=-1, keepdims=True)                    # (blk, 1)
    else:
        # Block-diagonal ones matrix built with 2-D iota + shifts (seg is a
        # power of two since it divides 128).  MXU has huge slack in this
        # memory-bound kernel, so the 128-wide matmul hides under the DMA.
        shift = seg.bit_length() - 1
        r = jax.lax.broadcasted_iota(jnp.int32, (lanes, lanes), 0) >> shift
        c = jax.lax.broadcasted_iota(jnp.int32, (lanes, lanes), 1) >> shift
        blockdiag = (r == c).astype(jnp.float32)                     # (128, 128)
        ss = jax.lax.dot(
            xsq, blockdiag,
            precision=jax.lax.Precision.HIGHEST,                     # keep f32 accuracy
            preferred_element_type=jnp.float32)                      # (blk, 128)

    # scale / max(||x||, eps) == scale * rsqrt(max(sum(x^2), eps^2))
    inv = scale_ref[0] * jax.lax.rsqrt(jnp.maximum(ss, eps * eps))

    # Re-read x (3 vld slots/cycle make this cheap) instead of keeping the f32
    # upcast live across the reduction -- matters for sub-32-bit inputs.
    o_ref[...] = (x_ref[...].astype(jnp.float32) * inv).astype(o_ref.dtype)


def scale_norm(x, scale, eps=1e-5):
    """ScaleNorm forward: x * (scale / clamp(||x||_2 over last dim, min=eps)).

    Args:
      x: (B, T, D) input.
      scale: scalar learned parameter (torch init = D ** 0.5).
      eps: numerical-stability floor on the norm.
    Returns:
      (B, T, D) output, same dtype as x.
    """
    B, T, D = x.shape
    n_rows = B * T

    itemsize = jnp.dtype(x.dtype).itemsize
    sub = {4: 8, 2: 16, 1: 32}.get(itemsize, 8)   # rows per sublane-packed vreg

    # Lane-dense repack: D < 128, D | 128, and the flattened element count
    # reshapes exactly into 128-lane rows.  Row-major reshape (no reordering).
    packed = (D < _LANE) and (_LANE % D == 0) and ((n_rows * D) % _LANE == 0)
    if packed:
        width = _LANE
        n_rows2 = (n_rows * D) // _LANE
    else:
        # TODO(synk): D that neither reaches 128 nor divides it (e.g. 48) still
        # under-fills the lane axis; a segmented repack across rows would fix it.
        width = D
        n_rows2 = n_rows
    x2d = x.reshape(n_rows2, width)

    # Row block from a ~4 MiB-per-tile budget, counted in f32 bytes so the
    # in-kernel f32 temporaries are included.  No artificial row cap.
    tile_budget_bytes = 4 * 1024 * 1024
    rows_fit = max(sub, (tile_budget_bytes // (width * 4)) // sub * sub)

    if n_rows2 <= sub:
        blk = n_rows2                                  # single full-extent block
    else:
        # Keep >= 2 blocks so "parallel" can shard across both TCs on v7x.
        half = _round_up((n_rows2 + 1) // 2, sub)
        blk = max(sub, min(rows_fit, half))

    # Ragged tail handled by Pallas block masking -- no host-side pad / slice.
    grid = (pl.cdiv(n_rows2, blk),)

    scale_arr = jnp.asarray(scale, dtype=jnp.float32).reshape(1)

    out2d = pl.pallas_call(
        functools.partial(_scalenorm_kernel, eps=float(eps), seg=D),
        out_shape=jax.ShapeDtypeStruct((n_rows2, width), x.dtype),
        grid_spec=pltpu.PrefetchScalarGridSpec(
            num_scalar_prefetch=0,
            grid=grid,
            in_specs=[
                pl.BlockSpec(memory_space=pltpu.SMEM),            # scale scalar
                pl.BlockSpec((blk, width), lambda i: (i, 0)),     # x tile
            ],
            out_specs=pl.BlockSpec((blk, width), lambda i: (i, 0)),
        ),
        compiler_params=pltpu.CompilerParams(
            dimension_semantics=("parallel",),    # row blocks across 2 TCs on v7x
            vmem_limit_bytes=48 * 1024 * 1024,    # > v5e 16 MiB default, < v7x 64 MiB
        ),
    )(scale_arr, x2d)

    return out2d.reshape(B, T, D)


def scale_norm_ref(x, scale, eps=1e-5):
    nrm = jnp.linalg.norm(x.astype(jnp.float32), axis=-1, keepdims=True)
    nrm = jnp.maximum(nrm, eps)
    return (x.astype(jnp.float32) * (scale / nrm)).astype(x.dtype)


if __name__ == "__main__":
    eps = 1e-5
    D = 32
    scale = jnp.float32(D ** 0.5)   # matches torch init: scale = sqrt(normalized_shape)

    # Case 1: (B, T, D_hidden) = (2, 8, 32) -> lane-dense packed path
    #         (16 rows x 32 = 512 elements reshape exactly into (4, 128)).
    x1 = jax.random.normal(jax.random.PRNGKey(0), (2, 8, D), dtype=jnp.float32)
    out1 = jax.block_until_ready(scale_norm(x1, scale, eps))
    ref1 = scale_norm_ref(x1, scale, eps)
    assert out1.shape == x1.shape
    assert jnp.allclose(out1, ref1, atol=2e-5, rtol=2e-5), "mismatch (packed path)"

    # Case 2: 14 rows x 32 does not pack into whole 128-lane rows -> row-wise
    #         fallback with a ragged last block (grid=2, no pad/slice).
    x2 = jax.random.normal(jax.random.PRNGKey(1), (2, 7, D), dtype=jnp.float32)
    out2 = jax.block_until_ready(scale_norm(x2, scale, eps))
    ref2 = scale_norm_ref(x2, scale, eps)
    assert out2.shape == x2.shape
    assert jnp.allclose(out2, ref2, atol=2e-5, rtol=2e-5), "mismatch (ragged path)"

    print("KERNEL_OK")
</pallas_src>

<mosaic_0001>
module attributes {stable_mosaic.version = 11 : i64} {
  func.func @_scalenorm_kernel(%arg0: i32, %arg1: memref<1xf32, #tpu.memory_space<smem>>, %arg2: memref<4x128xf32, #tpu.memory_space<vmem>>, %arg3: memref<4x128xf32, #tpu.memory_space<vmem>>) attributes {dimension_semantics = [#tpu.dimension_semantics<parallel>], iteration_bounds = array<i64: 1>, scalar_prefetch = 0 : i64, scratch_operands = 0 : i64, tpu.core_type = #tpu.core_type<tc>, window_params = [{transform_indices = @transform_0, window_bounds = array<i64: 1>}, {transform_indices = @transform_1, window_bounds = array<i64: 4, 128>}, {transform_indices = @transform_2, window_bounds = array<i64: 4, 128>}]} {
    %c0 = arith.constant 0 : index
    %c0_0 = arith.constant 0 : index
    %0 = vector.load %arg2[%c0, %c0_0] : memref<4x128xf32, #tpu.memory_space<vmem>>, vector<4x128xf32>
    %1 = arith.mulf %0, %0 : vector<4x128xf32>
    %2 = tpu.iota {dimensions = array<i32: 0>} : vector<128x128xi32>
    %c5_i32 = arith.constant 5 : i32
    %3 = vector.broadcast %c5_i32 : i32 to vector<128x128xi32>
    %4 = arith.shrsi %2, %3 : vector<128x128xi32>
    %5 = tpu.iota {dimensions = array<i32: 1>} : vector<128x128xi32>
    %c5_i32_1 = arith.constant 5 : i32
    %6 = vector.broadcast %c5_i32_1 : i32 to vector<128x128xi32>
    %7 = arith.shrsi %5, %6 : vector<128x128xi32>
    %8 = arith.cmpi eq, %4, %7 : vector<128x128xi32>
    %9 = arith.extui %8 : vector<128x128xi1> to vector<128x128xi32>
    %10 = arith.sitofp %9 : vector<128x128xi32> to vector<128x128xf32>
    %cst = arith.constant dense<0.000000e+00> : vector<4x128xf32>
    %11 = tpu.matmul %1, %10, %cst {dimension_numbers = #tpu.dot_dimension_numbers<[1], [0], [0], [1], [0, 0, 1, 1], [], []>, precision = #tpu.contract_precision<fp32>} : vector<4x128xf32>, vector<128x128xf32>, vector<4x128xf32> -> vector<4x128xf32>
    %c0_2 = arith.constant 0 : index
    %12 = memref.load %arg1[%c0_2] : memref<1xf32, #tpu.memory_space<smem>>
    %cst_3 = arith.constant 1.000000e-10 : f32
    %13 = vector.broadcast %cst_3 : f32 to vector<4x128xf32>
    %14 = arith.maximumf %11, %13 : vector<4x128xf32>
    %15 = math.rsqrt %14 : vector<4x128xf32>
    %16 = vector.broadcast %12 : f32 to vector<4x128xf32>
    %17 = arith.mulf %16, %15 : vector<4x128xf32>
    %c0_4 = arith.constant 0 : index
    %c0_5 = arith.constant 0 : index
    %18 = vector.load %arg2[%c0_4, %c0_5] : memref<4x128xf32, #tpu.memory_space<vmem>>, vector<4x128xf32>
    %19 = arith.mulf %18, %17 : vector<4x128xf32>
    %c0_6 = arith.constant 0 : index
    %c0_7 = arith.constant 0 : index
    %20 = vector.load %arg3[%c0_6, %c0_7] : memref<4x128xf32, #tpu.memory_space<vmem>>, vector<4x128xf32>
    tpu.vector_store %arg3[%c0_6, %c0_7], %19 {strides = array<i32>} : memref<4x128xf32, #tpu.memory_space<vmem>>, vector<4x128xf32>,
    return
  }
  func.func @transform_0(%arg0: i32) -> i32 {
    %c0_i32 = arith.constant 0 : i32
    %c0_i32_0 = arith.constant 0 : i32
    return %c0_i32 : i32
  }
  func.func @transform_1(%arg0: i32) -> (i32, i32) {
    %c0_i32 = arith.constant 0 : i32
    %c0_i32_0 = arith.constant 0 : i32
    return %arg0, %c0_i32 : i32, i32
  }
  func.func @transform_2(%arg0: i32) -> (i32, i32) {
    %c0_i32 = arith.constant 0 : i32
    %c0_i32_0 = arith.constant 0 : i32
    return %arg0, %c0_i32 : i32, i32
  }
}

</mosaic_0001>

<llo_original>
// kernel: tpu_custom_call.1
$region0: #{tpu_custom_call.1}
  #allocation0 [shape = 'u32[]', space=smem, size = 0x4, offset = 0x4, fixed_abs, tag = 'smem constant byte address 0x4 - core index']
  #allocation1 [shape = 'u32[144,128]{1,0:T(1,128)}', space=vmem, size = 0x12000, scoped, tag = 'internal scratch']
  #allocation2 [shape = 'f32[1]{0:T(128)S(6)}', space=smem, size = 0x200, scoped, tag = 'scoped memory for tpu_custom_call.1']
  %s0 = inlined_call_operand.<no memory space> [shape: f32[1], index: 0, kind: input, shape index: {}]
  %s1 = inlined_call_operand.hbm [shape: f32[4,128], index: 1, kind: input, shape index: {}]
  %s2 = inlined_call_operand.hbm [shape: f32[4,128], index: 2, kind: output, shape index: {}]
  %s3 = sld [smem:[#allocation0]]
  $region22: #{tpu_custom_call.1} parent=0
    _
  %s5 = ssub.s32 1, %s3
  %s6 = scalar_select 0, %s5, %s3
  %7 = sst [smem:[#allocation2]] %s0
  $region1: #{tpu_custom_call.1} parent=0
    #allocation3 [shape = 'u8[2048]{0}', space=vmem, size = 0x800, scoped, tag = 'input window, operand 1, single buffered']
    #allocation4 [shape = 's32[1]{0}', space=sflag, size = 0x4, scoped, tag = 'scoped memory for tpu_custom_call.1']
    #allocation5 [shape = 's32[1]{0}', space=sflag, size = 0x4, scoped, tag = 'scoped memory for tpu_custom_call.1']
    #allocation6 [shape = 'u8[2048]{0}', space=vmem, size = 0x800, scoped, tag = 'output window, operand 0, single buffered']
    %8 = vsyncpa [#allocation4], 0
    %9 = vsyncpa [#allocation5], 0
    // Predicated region
    $region2: #{tpu_custom_call.1} parent=1 // pred_check
      _
    $region3: #{tpu_custom_call.1} parent=1 // pred_check_branch
      %11 = sbr.rel (0) target = $region5
    $region4: #{tpu_custom_call.1} parent=1 // pred_region
      _
    $region5: #{tpu_custom_call.1} parent=1 // pred_fallthru
      _
    // Predicated region
    $region6: #{tpu_custom_call.1} parent=1 // pred_check
      _
    $region7: #{tpu_custom_call.1} parent=1 // pred_check_branch
      %13 = sbr.rel (0) target = $region9
    $region8: #{tpu_custom_call.1} parent=1 // pred_region
      %s15 = ssub.s32 64, 64
      %16 = vsyncadd [#allocation4], %s15
      %s18 = sshll.u32 [#allocation3], 4
      %s19 = int_to_ptr.vmem [resolvable:$true] %s18
      %21 = dma.hbm_to_vmem [thread:$0]  %s1, 64, %s19, [#allocation4]
    $region9: #{tpu_custom_call.1} parent=1 // pred_fallthru
      _
    // Predicated region
    $region10: #{tpu_custom_call.1} parent=1 // pred_check
      _
    $region11: #{tpu_custom_call.1} parent=1 // pred_check_branch
      %23 = sbr.rel (0) target = $region13
    $region12: #{tpu_custom_call.1} parent=1 // pred_region
      %24 = dma.done [#allocation4], 64
    $region13: #{tpu_custom_call.1} parent=1 // pred_fallthru
      _
    %v25 = vld [vmem:[#allocation3] sm:$0xf]
    %v26 = vmul.f32 %v25, %v25
    %v27 = vlaneseq
    %v28 = vshrl.u32 %v27, 7
    %v29 = vadd.s32 %v28, 8
    %v30 = vadd.s32 %v28, 16
    %v31 = vadd.s32 %v28, 24
    %v32 = vadd.s32 %v28, 32
    %v33 = vadd.s32 %v28, 40
    %v34 = vadd.s32 %v28, 48
    %v35 = vadd.s32 %v28, 56
    %v36 = vadd.s32 %v28, 64
    %v37 = vadd.s32 %v28, 72
    %v38 = vadd.s32 %v28, 80
    %v39 = vadd.s32 %v28, 88
    %v40 = vadd.s32 %v28, 96
    %v41 = vadd.s32 %v28, 104
    %v42 = vadd.s32 %v28, 112
    %v43 = vadd.s32 %v28, 120
    %v44 = vshra.s32 %v28, 5
    %v45 = vshra.s32 %v29, 5
    %v46 = vshra.s32 %v30, 5
    %v47 = vshra.s32 %v31, 5
    %v48 = vshra.s32 %v32, 5
    %v49 = vshra.s32 %v33, 5
    %v50 = vshra.s32 %v34, 5
    %v51 = vshra.s32 %v35, 5
    %v52 = vshra.s32 %v36, 5
    %v53 = vshra.s32 %v37, 5
    %v54 = vshra.s32 %v38, 5
    %v55 = vshra.s32 %v39, 5
    %v56 = vshra.s32 %v40, 5
    %v57 = vshra.s32 %v41, 5
    %v58 = vshra.s32 %v42, 5
    %v59 = vshra.s32 %v43, 5
    %v60 = vlaneseq
    %v61 = vand.u32 %v60, 127
    %v62 = vshra.s32 %v61, 5
    %vm63 = vcmp.eq.s32.totalorder %v44, %v62
    %vm64 = vcmp.eq.s32.totalorder %v45, %v62
    %vm65 = vcmp.eq.s32.totalorder %v46, %v62
    %vm66 = vcmp.eq.s32.totalorder %v47, %v62
    %vm67 = vcmp.eq.s32.totalorder %v48, %v62
    %vm68 = vcmp.eq.s32.totalorder %v49, %v62
    %vm69 = vcmp.eq.s32.totalorder %v50, %v62
    %vm70 = vcmp.eq.s32.totalorder %v51, %v62
    %vm71 = vcmp.eq.s32.totalorder %v52, %v62
    %vm72 = vcmp.eq.s32.totalorder %v53, %v62
    %vm73 = vcmp.eq.s32.totalorder %v54, %v62
    %vm74 = vcmp.eq.s32.totalorder %v55, %v62
    %vm75 = vcmp.eq.s32.totalorder %v56, %v62
    %vm76 = vcmp.eq.s32.totalorder %v57, %v62
    %vm77 = vcmp.eq.s32.totalorder %v58, %v62
    %vm78 = vcmp.eq.s32.totalorder %v59, %v62
    %v79 = vsel %vm63, 1, 0
    %v80 = vsel %vm64, 1, 0
    %v81 = vsel %vm65, 1, 0
    %v82 = vsel %vm66, 1, 0
    %v83 = vsel %vm67, 1, 0
    %v84 = vsel %vm68, 1, 0
    %v85 = vsel %vm69, 1, 0
    %v86 = vsel %vm70, 1, 0
    %v87 = vsel %vm71, 1, 0
    %v88 = vsel %vm72, 1, 0
    %v89 = vsel %vm73, 1, 0
    %v90 = vsel %vm74, 1, 0
    %v91 = vsel %vm75, 1, 0
    %v92 = vsel %vm76, 1, 0
    %v93 = vsel %vm77, 1, 0
    %v94 = vsel %vm78, 1, 0
    %v95 = vcvt.s32.f32 %v79
    %v96 = vcvt.s32.f32 %v80
    %v97 = vcvt.s32.f32 %v81
    %v98 = vcvt.s32.f32 %v82
    %v99 = vcvt.s32.f32 %v83
    %v100 = vcvt.s32.f32 %v84
    %v101 = vcvt.s32.f32 %v85
    %v102 = vcvt.s32.f32 %v86
    %v103 = vcvt.s32.f32 %v87
    %v104 = vcvt.s32.f32 %v88
    %v105 = vcvt.s32.f32 %v89
    %v106 = vcvt.s32.f32 %v90
    %v107 = vcvt.s32.f32 %v91
    %v108 = vcvt.s32.f32 %v92
    %v109 = vcvt.s32.f32 %v93
    %v110 = vcvt.s32.f32 %v94
    %111 = vmatprep.subr.mxu0 0.0
    %v112 = vand.u32 %v95, 4294901760
    %113 = vmatpush1.msra.mxu0 %v112
    %114 = vmatprep.subr.mxu0 0.0
    %v115 = vand.u32 %v96, 4294901760
    %116 = vmatpush1.msra.mxu0 %v115
    %117 = vmatprep.subr.mxu0 0.0
    %v118 = vand.u32 %v97, 4294901760
    %119 = vmatpush1.msra.mxu0 %v118
    %120 = vmatprep.subr.mxu0 0.0
    %v121 = vand.u32 %v98, 4294901760
    %122 = vmatpush1.msra.mxu0 %v121
    %123 = vmatprep.subr.mxu0 0.0
    %v124 = vand.u32 %v99, 4294901760
    %125 = vmatpush1.msra.mxu0 %v124
    %126 = vmatprep.subr.mxu0 0.0
    %v127 = vand.u32 %v100, 4294901760
    %128 = vmatpush1.msra.mxu0 %v127
    %129 = vmatprep.subr.mxu0 0.0
    %v130 = vand.u32 %v101, 4294901760
    %131 = vmatpush1.msra.mxu0 %v130
    %132 = vmatprep.subr.mxu0 0.0
    %v133 = vand.u32 %v102, 4294901760
    %134 = vmatpush1.msra.mxu0 %v133
    %135 = vmatprep.subr.mxu0 0.0
    %v136 = vand.u32 %v103, 4294901760
    %137 = vmatpush1.msra.mxu0 %v136
    %138 = vmatprep.subr.mxu0 0.0
    %v139 = vand.u32 %v104, 4294901760
    %140 = vmatpush1.msra.mxu0 %v139
    %141 = vmatprep.subr.mxu0 0.0
    %v142 = vand.u32 %v105, 4294901760
    %143 = vmatpush1.msra.mxu0 %v142
    %144 = vmatprep.subr.mxu0 0.0
    %v145 = vand.u32 %v106, 4294901760
    %146 = vmatpush1.msra.mxu0 %v145
    %147 = vmatprep.subr.mxu0 0.0
    %v148 = vand.u32 %v107, 4294901760
    %149 = vmatpush1.msra.mxu0 %v148
    %150 = vmatprep.subr.mxu0 0.0
    %v151 = vand.u32 %v108, 4294901760
    %152 = vmatpush1.msra.mxu0 %v151
    %153 = vmatprep.subr.mxu0 0.0
    %v154 = vand.u32 %v109, 4294901760
    %155 = vmatpush1.msra.mxu0 %v154
    %156 = vmatprep.subr.mxu0 0.0
    %v157 = vand.u32 %v110, 4294901760
    %158 = vmatpush1.msra.mxu0 %v157
    %159 = vmatprep.subr.mxu0 0.0
    %160 = vmatpush1.msra.mxu0 0.0
    %161 = vmatprep.subr.mxu0 0.0
    %162 = vmatpush1.msra.mxu0 0.0
    %163 = vmatprep.subr.mxu0 0.0
    %164 = vmatpush1.msra.mxu0 0.0
    %165 = vmatprep.subr.mxu0 0.0
    %166 = vmatpush1.msra.mxu0 0.0
    %167 = vmatprep.subr.mxu0 0.0
    %168 = vmatpush1.msra.mxu0 0.0
    %169 = vmatprep.subr.mxu0 0.0
    %170 = vmatpush1.msra.mxu0 0.0
    %171 = vmatprep.subr.mxu0 0.0
    %172 = vmatpush1.msra.mxu0 0.0
    %173 = vmatprep.subr.mxu0 0.0
    %174 = vmatpush1.msra.mxu0 0.0
    %175 = vmatprep.subr.mxu0 0.0
    %176 = vmatpush1.msra.mxu0 0.0
    %177 = vmatprep.subr.mxu0 0.0
    %178 = vmatpush1.msra.mxu0 0.0
    %179 = vmatprep.subr.mxu0 0.0
    %180 = vmatpush1.msra.mxu0 0.0
    %181 = vmatprep.subr.mxu0 0.0
    %182 = vmatpush1.msra.mxu0 0.0
    %183 = vmatprep.subr.mxu0 0.0
    %184 = vmatpush1.msra.mxu0 0.0
    %185 = vmatprep.subr.mxu0 0.0
    %186 = vmatpush1.msra.mxu0 0.0
    %187 = vmatprep.subr.mxu0 0.0
    %188 = vmatpush1.msra.mxu0 0.0
    %189 = vmatprep.subr.mxu0 0.0
    %190 = vmatpush1.msra.mxu0 0.0
    %191 = vmatprep.mubr.f32.mxu0 0.0
    %v192 = vand.u32 %v26, 4294901760
    %v193 = vsub.f32 %v26, %v192
    %v194 = vand.u32 %v193, 4294901760
    %v195 = vsub.f32 %v193, %v194
    %v196 = vand.u32 %v195, 4294901760
    %197 = vmatmul.mubr.f32.gmra.mrb[0].mxu0 %v196
    %v198 = vpop.f32.mrb[0].mxu0
    %v199 = vadd.f32 0.0, %v198
    %v200 = vpop.f32.mrb[0].mxu0
    %201 = vdwg.mxu0
    %202 = vmatprep.subr.mxu0 0.0
    %v203 = vand.u32 %v95, 4294901760
    %v204 = vsub.f32 %v95, %v203
    %v205 = vand.u32 %v204, 4294901760
    %v206 = vsub.f32 %v204, %v205
    %v207 = vand.u32 %v206, 4294901760
    %208 = vmatpush1.msra.mxu0 %v207
    %209 = vmatprep.subr.mxu0 0.0
    %v210 = vand.u32 %v96, 4294901760
    %v211 = vsub.f32 %v96, %v210
    %v212 = vand.u32 %v211, 4294901760
    %v213 = vsub.f32 %v211, %v212
    %v214 = vand.u32 %v213, 4294901760
    %215 = vmatpush1.msra.mxu0 %v214
    %216 = vmatprep.subr.mxu0 0.0
    %v217 = vand.u32 %v97, 4294901760
    %v218 = vsub.f32 %v97, %v217
    %v219 = vand.u32 %v218, 4294901760
    %v220 = vsub.f32 %v218, %v219
    %v221 = vand.u32 %v220, 4294901760
    %222 = vmatpush1.msra.mxu0 %v221
    %223 = vmatprep.subr.mxu0 0.0
    %v224 = vand.u32 %v98, 4294901760
    %v225 = vsub.f32 %v98, %v224
    %v226 = vand.u32 %v225, 4294901760
    %v227 = vsub.f32 %v225, %v226
    %v228 = vand.u32 %v227, 4294901760
    %229 = vmatpush1.msra.mxu0 %v228
    %230 = vmatprep.subr.mxu0 0.0
    %v231 = vand.u32 %v99, 4294901760
    %v232 = vsub.f32 %v99, %v231
    %v233 = vand.u32 %v232, 4294901760
    %v234 = vsub.f32 %v232, %v233
    %v235 = vand.u32 %v234, 4294901760
    %236 = vmatpush1.msra.mxu0 %v235
    %237 = vmatprep.subr.mxu0 0.0
    %v238 = vand.u32 %v100, 4294901760
    %v239 = vsub.f32 %v100, %v238
    %v240 = vand.u32 %v239, 4294901760
    %v241 = vsub.f32 %v239, %v240
    %v242 = vand.u32 %v241, 4294901760
    %243 = vmatpush1.msra.mxu0 %v242
    %244 = vmatprep.subr.mxu0 0.0
    %v245 = vand.u32 %v101, 4294901760
    %v246 = vsub.f32 %v101, %v245
    %v247 = vand.u32 %v246, 4294901760
    %v248 = vsub.f32 %v246, %v247
    %v249 = vand.u32 %v248, 4294901760
    %250 = vmatpush1.msra.mxu0 %v249
    %251 = vmatprep.subr.mxu0 0.0
    %v252 = vand.u32 %v102, 4294901760
    %v253 = vsub.f32 %v102, %v252
    %v254 = vand.u32 %v253, 4294901760
    %v255 = vsub.f32 %v253, %v254
    %v256 = vand.u32 %v255, 4294901760
    %257 = vmatpush1.msra.mxu0 %v256
    %258 = vmatprep.subr.mxu0 0.0
    %v259 = vand.u32 %v103, 4294901760
    %v260 = vsub.f32 %v103, %v259
    %v261 = vand.u32 %v260, 4294901760
    %v262 = vsub.f32 %v260, %v261
    %v263 = vand.u32 %v262, 4294901760
    %264 = vmatpush1.msra.mxu0 %v263
    %265 = vmatprep.subr.mxu0 0.0
    %v266 = vand.u32 %v104, 4294901760
    %v267 = vsub.f32 %v104, %v266
    %v268 = vand.u32 %v267, 4294901760
    %v269 = vsub.f32 %v267, %v268
    %v270 = vand.u32 %v269, 4294901760
    %271 = vmatpush1.msra.mxu0 %v270
    %272 = vmatprep.subr.mxu0 0.0
    %v273 = vand.u32 %v105, 4294901760
    %v274 = vsub.f32 %v105, %v273
    %v275 = vand.u32 %v274, 4294901760
    %v276 = vsub.f32 %v274, %v275
    %v277 = vand.u32 %v276, 4294901760
    %278 = vmatpush1.msra.mxu0 %v277
    %279 = vmatprep.subr.mxu0 0.0
    %v280 = vand.u32 %v106, 4294901760
    %v281 = vsub.f32 %v106, %v280
    %v282 = vand.u32 %v281, 4294901760
    %v283 = vsub.f32 %v281, %v282
    %v284 = vand.u32 %v283, 4294901760
    %285 = vmatpush1.msra.mxu0 %v284
    %286 = vmatprep.subr.mxu0 0.0
    %v287 = vand.u32 %v107, 4294901760
    %v288 = vsub.f32 %v107, %v287
    %v289 = vand.u32 %v288, 4294901760
    %v290 = vsub.f32 %v288, %v289
    %v291 = vand.u32 %v290, 4294901760
    %292 = vmatpush1.msra.mxu0 %v291
    %293 = vmatprep.subr.mxu0 0.0
    %v294 = vand.u32 %v108, 4294901760
    %v295 = vsub.f32 %v108, %v294
    %v296 = vand.u32 %v295, 4294901760
    %v297 = vsub.f32 %v295, %v296
    %v298 = vand.u32 %v297, 4294901760
    %299 = vmatpush1.msra.mxu0 %v298
    %300 = vmatprep.subr.mxu0 0.0
    %v301 = vand.u32 %v109, 4294901760
    %v302 = vsub.f32 %v109, %v301
    %v303 = vand.u32 %v302, 4294901760
    %v304 = vsub.f32 %v302, %v303
    %v305 = vand.u32 %v304, 4294901760
    %306 = vmatpush1.msra.mxu0 %v305
    %307 = vmatprep.subr.mxu0 0.0
    %v308 = vand.u32 %v110, 4294901760
    %v309 = vsub.f32 %v110, %v308
    %v310 = vand.u32 %v309, 4294901760
    %v311 = vsub.f32 %v309, %v310
    %v312 = vand.u32 %v311, 4294901760
    %313 = vmatpush1.msra.mxu0 %v312
    %314 = vmatprep.subr.mxu0 0.0
    %315 = vmatpush1.msra.mxu0 0.0
    %316 = vmatprep.subr.mxu0 0.0
    %317 = vmatpush1.msra.mxu0 0.0
    %318 = vmatprep.subr.mxu0 0.0
    %319 = vmatpush1.msra.mxu0 0.0
    %320 = vmatprep.subr.mxu0 0.0
    %321 = vmatpush1.msra.mxu0 0.0
    %322 = vmatprep.subr.mxu0 0.0
    %323 = vmatpush1.msra.mxu0 0.0
    %324 = vmatprep.subr.mxu0 0.0
    %325 = vmatpush1.msra.mxu0 0.0
    %326 = vmatprep.subr.mxu0 0.0
    %327 = vmatpush1.msra.mxu0 0.0
    %328 = vmatprep.subr.mxu0 0.0
    %329 = vmatpush1.msra.mxu0 0.0
    %330 = vmatprep.subr.mxu0 0.0
    %331 = vmatpush1.msra.mxu0 0.0
    %332 = vmatprep.subr.mxu0 0.0
    %333 = vmatpush1.msra.mxu0 0.0
    %334 = vmatprep.subr.mxu0 0.0
    %335 = vmatpush1.msra.mxu0 0.0
    %336 = vmatprep.subr.mxu0 0.0
    %337 = vmatpush1.msra.mxu0 0.0
    %338 = vmatprep.subr.mxu0 0.0
    %339 = vmatpush1.msra.mxu0 0.0
    %340 = vmatprep.subr.mxu0 0.0
    %341 = vmatpush1.msra.mxu0 0.0
    %342 = vmatprep.subr.mxu0 0.0
    %343 = vmatpush1.msra.mxu0 0.0
    %344 = vmatprep.subr.mxu0 0.0
    %345 = vmatpush1.msra.mxu0 0.0
    %346 = vmatprep.mubr.f32.mxu0 0.0
    %v347 = vand.u32 %v26, 4294901760
    %348 = vmatmul.mubr.f32.gmra.mrb[0].mxu0 %v347
    %v349 = vpop.f32.mrb[0].mxu0
    %v350 = vadd.f32 %v199, %v349
    %v351 = vpop.f32.mrb[0].mxu0
    %352 = vdwg.mxu0
    %353 = vmatprep.subr.mxu0 0.0
    %v354 = vand.u32 %v95, 4294901760
    %v355 = vsub.f32 %v95, %v354
    %356 = vmatpush1.msra.mxu0 %v355
    %357 = vmatprep.subr.mxu0 0.0
    %v358 = vand.u32 %v96, 4294901760
    %v359 = vsub.f32 %v96, %v358
    %360 = vmatpush1.msra.mxu0 %v359
    %361 = vmatprep.subr.mxu0 0.0
    %v362 = vand.u32 %v97, 4294901760
    %v363 = vsub.f32 %v97, %v362
    %364 = vmatpush1.msra.mxu0 %v363
    %365 = vmatprep.subr.mxu0 0.0
    %v366 = vand.u32 %v98, 4294901760
    %v367 = vsub.f32 %v98, %v366
    %368 = vmatpush1.msra.mxu0 %v367
    %369 = vmatprep.subr.mxu0 0.0
    %v370 = vand.u32 %v99, 4294901760
    %v371 = vsub.f32 %v99, %v370
    %372 = vmatpush1.msra.mxu0 %v371
    %373 = vmatprep.subr.mxu0 0.0
    %v374 = vand.u32 %v100, 4294901760
    %v375 = vsub.f32 %v100, %v374
    %376 = vmatpush1.msra.mxu0 %v375
    %377 = vmatprep.subr.mxu0 0.0
    %v378 = vand.u32 %v101, 4294901760
    %v379 = vsub.f32 %v101, %v378
    %380 = vmatpush1.msra.mxu0 %v379
    %381 = vmatprep.subr.mxu0 0.0
    %v382 = vand.u32 %v102, 4294901760
    %v383 = vsub.f32 %v102, %v382
    %384 = vmatpush1.msra.mxu0 %v383
    %385 = vmatprep.subr.mxu0 0.0
    %v386 = vand.u32 %v103, 4294901760
    %v387 = vsub.f32 %v103, %v386
    %388 = vmatpush1.msra.mxu0 %v387
    %389 = vmatprep.subr.mxu0 0.0
    %v390 = vand.u32 %v104, 4294901760
    %v391 = vsub.f32 %v104, %v390
    %392 = vmatpush1.msra.mxu0 %v391
    %393 = vmatprep.subr.mxu0 0.0
    %v394 = vand.u32 %v105, 4294901760
    %v395 = vsub.f32 %v105, %v394
    %396 = vmatpush1.msra.mxu0 %v395
    %397 = vmatprep.subr.mxu0 0.0
    %v398 = vand.u32 %v106, 4294901760
    %v399 = vsub.f32 %v106, %v398
    %400 = vmatpush1.msra.mxu0 %v399
    %401 = vmatprep.subr.mxu0 0.0
    %v402 = vand.u32 %v107, 4294901760
    %v403 = vsub.f32 %v107, %v402
    %404 = vmatpush1.msra.mxu0 %v403
    %405 = vmatprep.subr.mxu0 0.0
    %v406 = vand.u32 %v108, 4294901760
    %v407 = vsub.f32 %v108, %v406
    %408 = vmatpush1.msra.mxu0 %v407
    %409 = vmatprep.subr.mxu0 0.0
    %v410 = vand.u32 %v109, 4294901760
    %v411 = vsub.f32 %v109, %v410
    %412 = vmatpush1.msra.mxu0 %v411
    %413 = vmatprep.subr.mxu0 0.0
    %v414 = vand.u32 %v110, 4294901760
    %v415 = vsub.f32 %v110, %v414
    %416 = vmatpush1.msra.mxu0 %v415
    %417 = vmatprep.subr.mxu0 0.0
    %418 = vmatpush1.msra.mxu0 0.0
    %419 = vmatprep.subr.mxu0 0.0
    %420 = vmatpush1.msra.mxu0 0.0
    %421 = vmatprep.subr.mxu0 0.0
    %422 = vmatpush1.msra.mxu0 0.0
    %423 = vmatprep.subr.mxu0 0.0
    %424 = vmatpush1.msra.mxu0 0.0
    %425 = vmatprep.subr.mxu0 0.0
    %426 = vmatpush1.msra.mxu0 0.0
    %427 = vmatprep.subr.mxu0 0.0
    %428 = vmatpush1.msra.mxu0 0.0
    %429 = vmatprep.subr.mxu0 0.0
    %430 = vmatpush1.msra.mxu0 0.0
    %431 = vmatprep.subr.mxu0 0.0
    %432 = vmatpush1.msra.mxu0 0.0
    %433 = vmatprep.subr.mxu0 0.0
    %434 = vmatpush1.msra.mxu0 0.0
    %435 = vmatprep.subr.mxu0 0.0
    %436 = vmatpush1.msra.mxu0 0.0
    %437 = vmatprep.subr.mxu0 0.0
    %438 = vmatpush1.msra.mxu0 0.0
    %439 = vmatprep.subr.mxu0 0.0
    %440 = vmatpush1.msra.mxu0 0.0
    %441 = vmatprep.subr.mxu0 0.0
    %442 = vmatpush1.msra.mxu0 0.0
    %443 = vmatprep.subr.mxu0 0.0
    %444 = vmatpush1.msra.mxu0 0.0
    %445 = vmatprep.subr.mxu0 0.0
    %446 = vmatpush1.msra.mxu0 0.0
    %447 = vmatprep.subr.mxu0 0.0
    %448 = vmatpush1.msra.mxu0 0.0
    %449 = vmatprep.mubr.f32.mxu0 0.0
    %v450 = vand.u32 %v26, 4294901760
    %v451 = vsub.f32 %v26, %v450
    %452 = vmatmul.mubr.f32.gmra.mrb[0].mxu0 %v451
    %v453 = vpop.f32.mrb[0].mxu0
    %v454 = vadd.f32 %v350, %v453
    %v455 = vpop.f32.mrb[0].mxu0
    %456 = vdwg.mxu0
    %457 = vmatprep.subr.mxu0 0.0
    %v458 = vand.u32 %v95, 4294901760
    %459 = vmatpush1.msra.mxu0 %v458
    %460 = vmatprep.subr.mxu0 0.0
    %v461 = vand.u32 %v96, 4294901760
    %462 = vmatpush1.msra.mxu0 %v461
    %463 = vmatprep.subr.mxu0 0.0
    %v464 = vand.u32 %v97, 4294901760
    %465 = vmatpush1.msra.mxu0 %v464
    %466 = vmatprep.subr.mxu0 0.0
    %v467 = vand.u32 %v98, 4294901760
    %468 = vmatpush1.msra.mxu0 %v467
    %469 = vmatprep.subr.mxu0 0.0
    %v470 = vand.u32 %v99, 4294901760
    %471 = vmatpush1.msra.mxu0 %v470
    %472 = vmatprep.subr.mxu0 0.0
    %v473 = vand.u32 %v100, 4294901760
    %474 = vmatpush1.msra.mxu0 %v473
    %475 = vmatprep.subr.mxu0 0.0
    %v476 = vand.u32 %v101, 4294901760
    %477 = vmatpush1.msra.mxu0 %v476
    %478 = vmatprep.subr.mxu0 0.0
    %v479 = vand.u32 %v102, 4294901760
    %480 = vmatpush1.msra.mxu0 %v479
    %481 = vmatprep.subr.mxu0 0.0
    %v482 = vand.u32 %v103, 4294901760
    %483 = vmatpush1.msra.mxu0 %v482
    %484 = vmatprep.subr.mxu0 0.0
    %v485 = vand.u32 %v104, 4294901760
    %486 = vmatpush1.msra.mxu0 %v485
    %487 = vmatprep.subr.mxu0 0.0
    %v488 = vand.u32 %v105, 4294901760
    %489 = vmatpush1.msra.mxu0 %v488
    %490 = vmatprep.subr.mxu0 0.0
    %v491 = vand.u32 %v106, 4294901760
    %492 = vmatpush1.msra.mxu0 %v491
    %493 = vmatprep.subr.mxu0 0.0
    %v494 = vand.u32 %v107, 4294901760
    %495 = vmatpush1.msra.mxu0 %v494
    %496 = vmatprep.subr.mxu0 0.0
    %v497 = vand.u32 %v108, 4294901760
    %498 = vmatpush1.msra.mxu0 %v497
    %499 = vmatprep.subr.mxu0 0.0
    %v500 = vand.u32 %v109, 4294901760
    %501 = vmatpush1.msra.mxu0 %v500
    %502 = vmatprep.subr.mxu0 0.0
    %v503 = vand.u32 %v110, 4294901760
    %504 = vmatpush1.msra.mxu0 %v503
    %505 = vmatprep.subr.mxu0 0.0
    %506 = vmatpush1.msra.mxu0 0.0
    %507 = vmatprep.subr.mxu0 0.0
    %508 = vmatpush1.msra.mxu0 0.0
    %509 = vmatprep.subr.mxu0 0.0
    %510 = vmatpush1.msra.mxu0 0.0
    %511 = vmatprep.subr.mxu0 0.0
    %512 = vmatpush1.msra.mxu0 0.0
    %513 = vmatprep.subr.mxu0 0.0
    %514 = vmatpush1.msra.mxu0 0.0
    %515 = vmatprep.subr.mxu0 0.0
    %516 = vmatpush1.msra.mxu0 0.0
    %517 = vmatprep.subr.mxu0 0.0
    %518 = vmatpush1.msra.mxu0 0.0
    %519 = vmatprep.subr.mxu0 0.0
    %520 = vmatpush1.msra.mxu0 0.0
    %521 = vmatprep.subr.mxu0 0.0
    %522 = vmatpush1.msra.mxu0 0.0
    %523 = vmatprep.subr.mxu0 0.0
    %524 = vmatpush1.msra.mxu0 0.0
    %525 = vmatprep.subr.mxu0 0.0
    %526 = vmatpush1.msra.mxu0 0.0
    %527 = vmatprep.subr.mxu0 0.0
    %528 = vmatpush1.msra.mxu0 0.0
    %529 = vmatprep.subr.mxu0 0.0
    %530 = vmatpush1.msra.mxu0 0.0
    %531 = vmatprep.subr.mxu0 0.0
    %532 = vmatpush1.msra.mxu0 0.0
    %533 = vmatprep.subr.mxu0 0.0
    %534 = vmatpush1.msra.mxu0 0.0
    %535 = vmatprep.subr.mxu0 0.0
    %536 = vmatpush1.msra.mxu0 0.0
    %537 = vmatprep.mubr.f32.mxu0 0.0
    %v538 = vand.u32 %v26, 4294901760
    %v539 = vsub.f32 %v26, %v538
    %v540 = vand.u32 %v539, 4294901760
    %541 = vmatmul.mubr.f32.gmra.mrb[0].mxu0 %v540
    %v542 = vpop.f32.mrb[0].mxu0
    %v543 = vadd.f32 %v454, %v542
    %v544 = vpop.f32.mrb[0].mxu0
    %545 = vdwg.mxu0
    %546 = vmatprep.subr.mxu0 0.0
    %v547 = vand.u32 %v95, 4294901760
    %v548 = vsub.f32 %v95, %v547
    %v549 = vand.u32 %v548, 4294901760
    %550 = vmatpush1.msra.mxu0 %v549
    %551 = vmatprep.subr.mxu0 0.0
    %v552 = vand.u32 %v96, 4294901760
    %v553 = vsub.f32 %v96, %v552
    %v554 = vand.u32 %v553, 4294901760
    %555 = vmatpush1.msra.mxu0 %v554
    %556 = vmatprep.subr.mxu0 0.0
    %v557 = vand.u32 %v97, 4294901760
    %v558 = vsub.f32 %v97, %v557
    %v559 = vand.u32 %v558, 4294901760
    %560 = vmatpush1.msra.mxu0 %v559
    %561 = vmatprep.subr.mxu0 0.0
    %v562 = vand.u32 %v98, 4294901760
    %v563 = vsub.f32 %v98, %v562
    %v564 = vand.u32 %v563, 4294901760
    %565 = vmatpush1.msra.mxu0 %v564
    %566 = vmatprep.subr.mxu0 0.0
    %v567 = vand.u32 %v99, 4294901760
    %v568 = vsub.f32 %v99, %v567
    %v569 = vand.u32 %v568, 4294901760
    %570 = vmatpush1.msra.mxu0 %v569
    %571 = vmatprep.subr.mxu0 0.0
    %v572 = vand.u32 %v100, 4294901760
    %v573 = vsub.f32 %v100, %v572
    %v574 = vand.u32 %v573, 4294901760
    %575 = vmatpush1.msra.mxu0 %v574
    %576 = vmatprep.subr.mxu0 0.0
    %v577 = vand.u32 %v101, 4294901760
    %v578 = vsub.f32 %v101, %v577
    %v579 = vand.u32 %v578, 4294901760
    %580 = vmatpush1.msra.mxu0 %v579
    %581 = vmatprep.subr.mxu0 0.0
    %v582 = vand.u32 %v102, 4294901760
    %v583 = vsub.f32 %v102, %v582
    %v584 = vand.u32 %v583, 4294901760
    %585 = vmatpush1.msra.mxu0 %v584
    %586 = vmatprep.subr.mxu0 0.0
    %v587 = vand.u32 %v103, 4294901760
    %v588 = vsub.f32 %v103, %v587
    %v589 = vand.u32 %v588, 4294901760
    %590 = vmatpush1.msra.mxu0 %v589
    %591 = vmatprep.subr.mxu0 0.0
    %v592 = vand.u32 %v104, 4294901760
    %v593 = vsub.f32 %v104, %v592
    %v594 = vand.u32 %v593, 4294901760
    %595 = vmatpush1.msra.mxu0 %v594
    %596 = vmatprep.subr.mxu0 0.0
    %v597 = vand.u32 %v105, 4294901760
    %v598 = vsub.f32 %v105, %v597
    %v599 = vand.u32 %v598, 4294901760
    %600 = vmatpush1.msra.mxu0 %v599
    %601 = vmatprep.subr.mxu0 0.0
    %v602 = vand.u32 %v106, 4294901760
    %v603 = vsub.f32 %v106, %v602
    %v604 = vand.u32 %v603, 4294901760
    %605 = vmatpush1.msra.mxu0 %v604
    %606 = vmatprep.subr.mxu0 0.0
    %v607 = vand.u32 %v107, 4294901760
    %v608 = vsub.f32 %v107, %v607
    %v609 = vand.u32 %v608, 4294901760
    %610 = vmatpush1.msra.mxu0 %v609
    %611 = vmatprep.subr.mxu0 0.0
    %v612 = vand.u32 %v108, 4294901760
    %v613 = vsub.f32 %v108, %v612
    %v614 = vand.u32 %v613, 4294901760
    %615 = vmatpush1.msra.mxu0 %v614
    %616 = vmatprep.subr.mxu0 0.0
    %v617 = vand.u32 %v109, 4294901760
    %v618 = vsub.f32 %v109, %v617
    %v619 = vand.u32 %v618, 4294901760
    %620 = vmatpush1.msra.mxu0 %v619
    %621 = vmatprep.subr.mxu0 0.0
    %v622 = vand.u32 %v110, 4294901760
    %v623 = vsub.f32 %v110, %v622
    %v624 = vand.u32 %v623, 4294901760
    %625 = vmatpush1.msra.mxu0 %v624
    %626 = vmatprep.subr.mxu0 0.0
    %627 = vmatpush1.msra.mxu0 0.0
    %628 = vmatprep.subr.mxu0 0.0
    %629 = vmatpush1.msra.mxu0 0.0
    %630 = vmatprep.subr.mxu0 0.0
    %631 = vmatpush1.msra.mxu0 0.0
    %632 = vmatprep.subr.mxu0 0.0
    %633 = vmatpush1.msra.mxu0 0.0
    %634 = vmatprep.subr.mxu0 0.0
    %635 = vmatpush1.msra.mxu0 0.0
    %636 = vmatprep.subr.mxu0 0.0
    %637 = vmatpush1.msra.mxu0 0.0
    %638 = vmatprep.subr.mxu0 0.0
    %639 = vmatpush1.msra.mxu0 0.0
    %640 = vmatprep.subr.mxu0 0.0
    %641 = vmatpush1.msra.mxu0 0.0
    %642 = vmatprep.subr.mxu0 0.0
    %643 = vmatpush1.msra.mxu0 0.0
    %644 = vmatprep.subr.mxu0 0.0
    %645 = vmatpush1.msra.mxu0 0.0
    %646 = vmatprep.subr.mxu0 0.0
    %647 = vmatpush1.msra.mxu0 0.0
    %648 = vmatprep.subr.mxu0 0.0
    %649 = vmatpush1.msra.mxu0 0.0
    %650 = vmatprep.subr.mxu0 0.0
    %651 = vmatpush1.msra.mxu0 0.0
    %652 = vmatprep.subr.mxu0 0.0
    %653 = vmatpush1.msra.mxu0 0.0
    %654 = vmatprep.subr.mxu0 0.0
    %655 = vmatpush1.msra.mxu0 0.0
    %656 = vmatprep.subr.mxu0 0.0
    %657 = vmatpush1.msra.mxu0 0.0
    %658 = vmatprep.mubr.f32.mxu0 0.0
    %v659 = vand.u32 %v26, 4294901760
    %660 = vmatmul.mubr.f32.gmra.mrb[0].mxu0 %v659
    %v661 = vpop.f32.mrb[0].mxu0
    %v662 = vadd.f32 %v543, %v661
    %v663 = vpop.f32.mrb[0].mxu0
    %664 = vdwg.mxu0
    %665 = vmatprep.subr.mxu0 0.0
    %v666 = vand.u32 %v95, 4294901760
    %667 = vmatpush1.msra.mxu0 %v666
    %668 = vmatprep.subr.mxu0 0.0
    %v669 = vand.u32 %v96, 4294901760
    %670 = vmatpush1.msra.mxu0 %v669
    %671 = vmatprep.subr.mxu0 0.0
    %v672 = vand.u32 %v97, 4294901760
    %673 = vmatpush1.msra.mxu0 %v672
    %674 = vmatprep.subr.mxu0 0.0
    %v675 = vand.u32 %v98, 4294901760
    %676 = vmatpush1.msra.mxu0 %v675
    %677 = vmatprep.subr.mxu0 0.0
    %v678 = vand.u32 %v99, 4294901760
    %679 = vmatpush1.msra.mxu0 %v678
    %680 = vmatprep.subr.mxu0 0.0
    %v681 = vand.u32 %v100, 4294901760
    %682 = vmatpush1.msra.mxu0 %v681
    %683 = vmatprep.subr.mxu0 0.0
    %v684 = vand.u32 %v101, 4294901760
    %685 = vmatpush1.msra.mxu0 %v684
    %686 = vmatprep.subr.mxu0 0.0
    %v687 = vand.u32 %v102, 4294901760
    %688 = vmatpush1.msra.mxu0 %v687
    %689 = vmatprep.subr.mxu0 0.0
    %v690 = vand.u32 %v103, 4294901760
    %691 = vmatpush1.msra.mxu0 %v690
    %692 = vmatprep.subr.mxu0 0.0
    %v693 = vand.u32 %v104, 4294901760
    %694 = vmatpush1.msra.mxu0 %v693
    %695 = vmatprep.subr.mxu0 0.0
    %v696 = vand.u32 %v105, 4294901760
    %697 = vmatpush1.msra.mxu0 %v696
    %698 = vmatprep.subr.mxu0 0.0
    %v699 = vand.u32 %v106, 4294901760
    %700 = vmatpush1.msra.mxu0 %v699
    %701 = vmatprep.subr.mxu0 0.0
    %v702 = vand.u32 %v107, 4294901760
    %703 = vmatpush1.msra.mxu0 %v702
    %704 = vmatprep.subr.mxu0 0.0
    %v705 = vand.u32 %v108, 4294901760
    %706 = vmatpush1.msra.mxu0 %v705
    %707 = vmatprep.subr.mxu0 0.0
    %v708 = vand.u32 %v109, 4294901760
    %709 = vmatpush1.msra.mxu0 %v708
    %710 = vmatprep.subr.mxu0 0.0
    %v711 = vand.u32 %v110, 4294901760
    %712 = vmatpush1.msra.mxu0 %v711
    %713 = vmatprep.subr.mxu0 0.0
    %714 = vmatpush1.msra.mxu0 0.0
    %715 = vmatprep.subr.mxu0 0.0
    %716 = vmatpush1.msra.mxu0 0.0
    %717 = vmatprep.subr.mxu0 0.0
    %718 = vmatpush1.msra.mxu0 0.0
    %719 = vmatprep.subr.mxu0 0.0
    %720 = vmatpush1.msra.mxu0 0.0
    %721 = vmatprep.subr.mxu0 0.0
    %722 = vmatpush1.msra.mxu0 0.0
    %723 = vmatprep.subr.mxu0 0.0
    %724 = vmatpush1.msra.mxu0 0.0
    %725 = vmatprep.subr.mxu0 0.0
    %726 = vmatpush1.msra.mxu0 0.0
    %727 = vmatprep.subr.mxu0 0.0
    %728 = vmatpush1.msra.mxu0 0.0
    %729 = vmatprep.subr.mxu0 0.0
    %730 = vmatpush1.msra.mxu0 0.0
    %731 = vmatprep.subr.mxu0 0.0
    %732 = vmatpush1.msra.mxu0 0.0
    %733 = vmatprep.subr.mxu0 0.0
    %734 = vmatpush1.msra.mxu0 0.0
    %735 = vmatprep.subr.mxu0 0.0
    %736 = vmatpush1.msra.mxu0 0.0
    %737 = vmatprep.subr.mxu0 0.0
    %738 = vmatpush1.msra.mxu0 0.0
    %739 = vmatprep.subr.mxu0 0.0
    %740 = vmatpush1.msra.mxu0 0.0
    %741 = vmatprep.subr.mxu0 0.0
    %742 = vmatpush1.msra.mxu0 0.0
    %743 = vmatprep.subr.mxu0 0.0
    %744 = vmatpush1.msra.mxu0 0.0
    %745 = vmatprep.mubr.f32.mxu0 0.0
    %v746 = vand.u32 %v26, 4294901760
    %747 = vmatmul.mubr.f32.gmra.mrb[0].mxu0 %v746
    %v748 = vpop.f32.mrb[0].mxu0
    %v749 = vadd.f32 %v662, %v748
    %v750 = vpop.f32.mrb[0].mxu0
    %751 = vdwg.mxu0
    %s752 = sld [smem:[#allocation2]]
    %v753 = vmax.f32 %v749, 1e-10
    %v754 = vrsqrt.pop %v753
    %v755 = vstv %s752
    %v756 = vmul.f32 %v755, %v754
    %v757 = vmul.f32 %v25, %v756
    %758 = vst [vmem:[#allocation6] sm:$0xf] %v757
    // Predicated region
    $region14: #{tpu_custom_call.1} parent=1 // pred_check
      _
    $region15: #{tpu_custom_call.1} parent=1 // pred_check_branch
      %760 = sbr.rel (0) target = $region17
    $region16: #{tpu_custom_call.1} parent=1 // pred_region
      %s762 = ssub.s32 64, 64
      %763 = vsyncadd [#allocation5], %s762
      %s765 = sshll.u32 [#allocation6], 4
      %s766 = int_to_ptr.vmem [resolvable:$true] %s765
      %768 = dma.vmem_to_hbm [thread:$0]  %s766, 64, %s2, [#allocation5]
    $region17: #{tpu_custom_call.1} parent=1 // pred_fallthru
      _
    // Predicated region
    $region18: #{tpu_custom_call.1} parent=1 // pred_check
      _
    $region19: #{tpu_custom_call.1} parent=1 // pred_check_branch
      %770 = sbr.rel (0) target = $region21
    $region20: #{tpu_custom_call.1} parent=1 // pred_region
      %771 = dma.done [#allocation5], 64
    $region21: #{tpu_custom_call.1} parent=1 // pred_fallthru
      _
    %772 = vsyncpa [#allocation4], 1
    %773 = vsyncpa [#allocation5], 1

</llo_original>
